<compile_context>
chip_gen: v6e
topology: v6e:2x2x1
jax: 0.10.0
libtpu: 0.0.40
codegen_flags: <defaults>
</compile_context>

<pallas_src>
import functools

import numpy as np
import jax
import jax.numpy as jnp
from jax.experimental import pallas as pl
from jax.experimental.pallas import tpu as pltpu

# Conv hyper-parameters (fixed by the module definition).
KH, KW = 5, 11          # kernel size
SH, SW = 1, 6           # stride
PH, PW = 0, 2           # padding
DH, DW = 4, 20          # dilation


def _conv_kernel(x_ref, ah_ref, al_ref, b_ref, o_ref, *, OH, OW, Bblk):
    """Dilated/strided conv for 1 in / 1 out channel via an MXU gather-matmul.

    x_ref : (Bblk, H, W)  f32 VMEM -- raw input images (channel dim squeezed)
    ah_ref: (W, NL)       bf16 VMEM -- hi half of the width gather/weight matrix
    al_ref: (W, NL)       bf16 VMEM -- lo half (fp32 = hi + lo)
    b_ref : (1,)          f32 SMEM -- bias
    o_ref : (Bblk, OH, OW) f32 VMEM -- output block
    """
    bias = b_ref[0]

    def one_image(bi):
        xb = x_ref[bi]                                        # (H, W) f32
        # hi/lo bf16 split -> 3 MXU passes give ~fp32-accurate products.
        xh = xb.astype(jnp.bfloat16)
        xl = (xb - xh.astype(jnp.float32)).astype(jnp.bfloat16)
        ah = ah_ref[...]
        al = al_ref[...]
        y = (jnp.dot(xh, ah, preferred_element_type=jnp.float32)
             + jnp.dot(xl, ah, preferred_element_type=jnp.float32)
             + jnp.dot(xh, al, preferred_element_type=jnp.float32))  # (H, NL)
        # Height taps:  out[oh, ow] = sum_kh y[oh*SH + DH*kh, kh*OW + ow]
        acc = y[0:OH, 0:OW]
        for kh in range(1, KH):
            acc = acc + y[DH * kh:DH * kh + OH, kh * OW:kh * OW + OW]
        o_ref[bi] = acc + bias

    if Bblk <= 8:
        # Short static loop: full unroll for scheduler visibility.
        for bi in range(Bblk):
            one_image(bi)
    else:
        jax.lax.fori_loop(0, Bblk, lambda bi, c: (one_image(bi), c)[1], 0)


@jax.jit
def conv_example_forward(x, w, b):
    """x: (B, 1, H, W) float32 (NCHW, as in PyTorch).  Returns (B, 1, OH, OW)."""
    B, C, H, W = x.shape
    assert C == 1
    OH = (H + 2 * PH - DH * (KH - 1) - 1) // SH + 1
    OW = (W + 2 * PW - DW * (KW - 1) - 1) // SW + 1
    assert OH > 0 and OW > 0, "input too small for this conv geometry"
    NL = pl.cdiv(KH * OW, 128) * 128              # lane-padded gather columns

    # ---- width gather / weight matrix (tiny, depends only on w & shapes) ----
    # A[c, kh*OW + ow] = w[kh, kw]  iff  c == SW*ow + DW*kw - PW  (0 <= c < W).
    rows, cols, widx = [], [], []
    for kh in range(KH):
        for kw in range(KW):
            for ow in range(OW):
                c = SW * ow + DW * kw - PW
                if 0 <= c < W:
                    rows.append(c)
                    cols.append(kh * OW + ow)
                    widx.append(kh * KW + kw)
    rows = np.asarray(rows, np.int32)
    cols = np.asarray(cols, np.int32)
    widx = np.asarray(widx, np.int32)
    wflat = w.reshape(-1).astype(jnp.float32)
    a = jnp.zeros((W, NL), jnp.float32).at[rows, cols].set(wflat[widx])
    a_hi = a.astype(jnp.bfloat16)
    a_lo = (a - a_hi.astype(jnp.float32)).astype(jnp.bfloat16)

    # ---- batch blocking: ~2 MiB of input per grid step; Bblk divides B ------
    bytes_per_img = 4 * H * W
    Bblk = int(max(1, min(B, (2 * 2**20) // max(1, bytes_per_img), 64)))
    while B % Bblk:          # keep blocks exact (no partial tail blocks)
        Bblk -= 1
    grid = (B // Bblk,)

    # VMEM budget: double-buffered in/out blocks + resident gather matrices.
    blk_bytes = 4 * Bblk * H * W + 2 * (2 * W * NL) + 4 * Bblk * OH * OW
    vmem_limit = int(min(40 * 2**20, max(16 * 2**20, 4 * blk_bytes)))

    out = pl.pallas_call(
        functools.partial(_conv_kernel, OH=OH, OW=OW, Bblk=Bblk),
        out_shape=jax.ShapeDtypeStruct((B, 1, OH, OW), jnp.float32),
        grid=grid,
        in_specs=[
            # raw NCHW input, channel dim squeezed; full H, W per block
            pl.BlockSpec((Bblk, None, H, W), lambda i: (i, 0, 0, 0)),
            # gather matrices: constant index -> fetched once, stay resident
            pl.BlockSpec((W, NL), lambda i: (0, 0)),
            pl.BlockSpec((W, NL), lambda i: (0, 0)),
            pl.BlockSpec((1,), lambda i: (0,),
                         memory_space=pltpu.MemorySpace.SMEM),
        ],
        out_specs=pl.BlockSpec((Bblk, None, OH, OW), lambda i: (i, 0, 0, 0)),
        compiler_params=pltpu.CompilerParams(
            dimension_semantics=("parallel",),
            vmem_limit_bytes=vmem_limit,
        ),
    )(x, a_hi, a_lo, b)
    return out


def _reference(x, w, b):
    """Pure-JAX reference identical to nn.Conv2d semantics (f32 accumulate)."""
    y = jax.lax.conv_general_dilated(
        x, w.reshape(1, 1, KH, KW),
        window_strides=(SH, SW),
        padding=((PH, PH), (PW, PW)),
        rhs_dilation=(DH, DW),
        dimension_numbers=("NCHW", "OIHW", "NCHW"),
        precision=jax.lax.Precision.HIGHEST,
    )
    return y + b.reshape(1, 1, 1, 1)


if __name__ == "__main__":
    key = jax.random.PRNGKey(0)
    kx, kw_, kb = jax.random.split(key, 3)

    # PyTorch-style uniform(-1/sqrt(fan_in), 1/sqrt(fan_in)) init.
    fan_in = 1 * KH * KW
    bound = 1.0 / (fan_in ** 0.5)
    w = jax.random.uniform(kw_, (KH, KW), jnp.float32, -bound, bound)
    b = jax.random.uniform(kb, (1,), jnp.float32, -bound, bound)

    # Effective receptive field: width 20*(11-1)+1 = 201, height 4*(5-1)+1 = 17,
    # so width must be >= ~197 (after padding) and height >= 17.
    for (B, H, W) in [(2, 24, 256), (3, 41, 333)]:
        x = jax.random.normal(jax.random.fold_in(kx, W), (B, 1, H, W),
                              dtype=jnp.float32)
        y = jax.block_until_ready(conv_example_forward(x, w, b))
        y_ref = _reference(x, w, b)
        assert y.shape == y_ref.shape, (y.shape, y_ref.shape)
        err = float(jnp.max(jnp.abs(y - y_ref)))
        # bf16x3 MXU split is ~fp32; tolerance covers the dropped lo*lo term.
        assert err < 2e-4, f"mismatch vs reference conv: max abs err {err}"
    print("KERNEL_OK")
</pallas_src>

<mosaic_0001>
module attributes {stable_mosaic.version = 11 : i64} {
  func.func @_conv_kernel(%arg0: i32, %arg1: memref<2x1x24x256xf32, #tpu.memory_space<vmem>>, %arg2: memref<256x128xbf16, #tpu.memory_space<vmem>>, %arg3: memref<256x128xbf16, #tpu.memory_space<vmem>>, %arg4: memref<1xf32, #tpu.memory_space<smem>>, %arg5: memref<2x1x8x10xf32, #tpu.memory_space<vmem>>) attributes {dimension_semantics = [#tpu.dimension_semantics<parallel>], iteration_bounds = array<i64: 1>, scalar_prefetch = 0 : i64, scratch_operands = 0 : i64, tpu.core_type = #tpu.core_type<tc>, window_params = [{transform_indices = @transform_0, window_bounds = array<i64: 2, 1, 24, 256>}, {pipeline_mode = #tpu.pipeline_mode<synchronous>, transform_indices = @transform_1, window_bounds = array<i64: 256, 128>}, {pipeline_mode = #tpu.pipeline_mode<synchronous>, transform_indices = @transform_2, window_bounds = array<i64: 256, 128>}, {transform_indices = @transform_3, window_bounds = array<i64: 1>}, {transform_indices = @transform_4, window_bounds = array<i64: 2, 1, 8, 10>}]} {
    %c0 = arith.constant 0 : index
    %0 = memref.load %arg4[%c0] : memref<1xf32, #tpu.memory_space<smem>>
    %c0_0 = arith.constant 0 : index
    %c0_1 = arith.constant 0 : index
    %c0_2 = arith.constant 0 : index
    %c0_3 = arith.constant 0 : index
    %1 = vector.load %arg1[%c0_0, %c0_1, %c0_2, %c0_3] : memref<2x1x24x256xf32, #tpu.memory_space<vmem>>, vector<1x1x24x256xf32>
    %2 = vector.shape_cast %1 : vector<1x1x24x256xf32> to vector<24x256xf32>
    %3 = arith.truncf %2 : vector<24x256xf32> to vector<24x256xbf16>
    %4 = arith.extf %3 : vector<24x256xbf16> to vector<24x256xf32>
    %5 = arith.subf %2, %4 : vector<24x256xf32>
    %6 = arith.truncf %5 : vector<24x256xf32> to vector<24x256xbf16>
    %c0_4 = arith.constant 0 : index
    %c0_5 = arith.constant 0 : index
    %7 = vector.load %arg2[%c0_4, %c0_5] : memref<256x128xbf16, #tpu.memory_space<vmem>>, vector<256x128xbf16>
    %c0_6 = arith.constant 0 : index
    %c0_7 = arith.constant 0 : index
    %8 = vector.load %arg3[%c0_6, %c0_7] : memref<256x128xbf16, #tpu.memory_space<vmem>>, vector<256x128xbf16>
    %cst = arith.constant dense<0.000000e+00> : vector<24x128xf32>
    %9 = tpu.matmul %3, %7, %cst {dimension_numbers = #tpu.dot_dimension_numbers<[1], [0], [0], [1], [0, 0, 1, 1], [], []>} : vector<24x256xbf16>, vector<256x128xbf16>, vector<24x128xf32> -> vector<24x128xf32>
    %cst_8 = arith.constant dense<0.000000e+00> : vector<24x128xf32>
    %10 = tpu.matmul %6, %7, %cst_8 {dimension_numbers = #tpu.dot_dimension_numbers<[1], [0], [0], [1], [0, 0, 1, 1], [], []>} : vector<24x256xbf16>, vector<256x128xbf16>, vector<24x128xf32> -> vector<24x128xf32>
    %11 = arith.addf %9, %10 : vector<24x128xf32>
    %cst_9 = arith.constant dense<0.000000e+00> : vector<24x128xf32>
    %12 = tpu.matmul %3, %8, %cst_9 {dimension_numbers = #tpu.dot_dimension_numbers<[1], [0], [0], [1], [0, 0, 1, 1], [], []>} : vector<24x256xbf16>, vector<256x128xbf16>, vector<24x128xf32> -> vector<24x128xf32>
    %13 = arith.addf %11, %12 : vector<24x128xf32>
    %14 = vector.extract_strided_slice %13 {offsets = [0, 0], sizes = [8, 10], strides = [1, 1]} : vector<24x128xf32> to vector<8x10xf32>
    %15 = vector.extract_strided_slice %13 {offsets = [4, 10], sizes = [8, 10], strides = [1, 1]} : vector<24x128xf32> to vector<8x10xf32>
    %16 = arith.addf %14, %15 : vector<8x10xf32>
    %17 = vector.extract_strided_slice %13 {offsets = [8, 20], sizes = [8, 10], strides = [1, 1]} : vector<24x128xf32> to vector<8x10xf32>
    %18 = arith.addf %16, %17 : vector<8x10xf32>
    %19 = vector.extract_strided_slice %13 {offsets = [12, 30], sizes = [8, 10], strides = [1, 1]} : vector<24x128xf32> to vector<8x10xf32>
    %20 = arith.addf %18, %19 : vector<8x10xf32>
    %21 = vector.extract_strided_slice %13 {offsets = [16, 40], sizes = [8, 10], strides = [1, 1]} : vector<24x128xf32> to vector<8x10xf32>
    %22 = arith.addf %20, %21 : vector<8x10xf32>
    %23 = vector.broadcast %0 : f32 to vector<8x10xf32>
    %24 = arith.addf %22, %23 : vector<8x10xf32>
    %c0_10 = arith.constant 0 : index
    %c0_11 = arith.constant 0 : index
    %c0_12 = arith.constant 0 : index
    %c0_13 = arith.constant 0 : index
    %25 = vector.load %arg5[%c0_10, %c0_11, %c0_12, %c0_13] : memref<2x1x8x10xf32, #tpu.memory_space<vmem>>, vector<1x1x8x10xf32>
    %26 = vector.shape_cast %25 : vector<1x1x8x10xf32> to vector<8x10xf32>
    %27 = vector.shape_cast %24 : vector<8x10xf32> to vector<1x1x8x10xf32>
    tpu.vector_store %arg5[%c0_10, %c0_11, %c0_12, %c0_13], %27 {strides = array<i32>} : memref<2x1x8x10xf32, #tpu.memory_space<vmem>>, vector<1x1x8x10xf32>,
    %c1 = arith.constant 1 : index
    %c0_14 = arith.constant 0 : index
    %c0_15 = arith.constant 0 : index
    %c0_16 = arith.constant 0 : index
    %28 = vector.load %arg1[%c1, %c0_14, %c0_15, %c0_16] : memref<2x1x24x256xf32, #tpu.memory_space<vmem>>, vector<1x1x24x256xf32>
    %29 = vector.shape_cast %28 : vector<1x1x24x256xf32> to vector<24x256xf32>
    %30 = arith.truncf %29 : vector<24x256xf32> to vector<24x256xbf16>
    %31 = arith.extf %30 : vector<24x256xbf16> to vector<24x256xf32>
    %32 = arith.subf %29, %31 : vector<24x256xf32>
    %33 = arith.truncf %32 : vector<24x256xf32> to vector<24x256xbf16>
    %c0_17 = arith.constant 0 : index
    %c0_18 = arith.constant 0 : index
    %34 = vector.load %arg2[%c0_17, %c0_18] : memref<256x128xbf16, #tpu.memory_space<vmem>>, vector<256x128xbf16>
    %c0_19 = arith.constant 0 : index
    %c0_20 = arith.constant 0 : index
    %35 = vector.load %arg3[%c0_19, %c0_20] : memref<256x128xbf16, #tpu.memory_space<vmem>>, vector<256x128xbf16>
    %cst_21 = arith.constant dense<0.000000e+00> : vector<24x128xf32>
    %36 = tpu.matmul %30, %34, %cst_21 {dimension_numbers = #tpu.dot_dimension_numbers<[1], [0], [0], [1], [0, 0, 1, 1], [], []>} : vector<24x256xbf16>, vector<256x128xbf16>, vector<24x128xf32> -> vector<24x128xf32>
    %cst_22 = arith.constant dense<0.000000e+00> : vector<24x128xf32>
    %37 = tpu.matmul %33, %34, %cst_22 {dimension_numbers = #tpu.dot_dimension_numbers<[1], [0], [0], [1], [0, 0, 1, 1], [], []>} : vector<24x256xbf16>, vector<256x128xbf16>, vector<24x128xf32> -> vector<24x128xf32>
    %38 = arith.addf %36, %37 : vector<24x128xf32>
    %cst_23 = arith.constant dense<0.000000e+00> : vector<24x128xf32>
    %39 = tpu.matmul %30, %35, %cst_23 {dimension_numbers = #tpu.dot_dimension_numbers<[1], [0], [0], [1], [0, 0, 1, 1], [], []>} : vector<24x256xbf16>, vector<256x128xbf16>, vector<24x128xf32> -> vector<24x128xf32>
    %40 = arith.addf %38, %39 : vector<24x128xf32>
    %41 = vector.extract_strided_slice %40 {offsets = [0, 0], sizes = [8, 10], strides = [1, 1]} : vector<24x128xf32> to vector<8x10xf32>
    %42 = vector.extract_strided_slice %40 {offsets = [4, 10], sizes = [8, 10], strides = [1, 1]} : vector<24x128xf32> to vector<8x10xf32>
    %43 = arith.addf %41, %42 : vector<8x10xf32>
    %44 = vector.extract_strided_slice %40 {offsets = [8, 20], sizes = [8, 10], strides = [1, 1]} : vector<24x128xf32> to vector<8x10xf32>
    %45 = arith.addf %43, %44 : vector<8x10xf32>
    %46 = vector.extract_strided_slice %40 {offsets = [12, 30], sizes = [8, 10], strides = [1, 1]} : vector<24x128xf32> to vector<8x10xf32>
    %47 = arith.addf %45, %46 : vector<8x10xf32>
    %48 = vector.extract_strided_slice %40 {offsets = [16, 40], sizes = [8, 10], strides = [1, 1]} : vector<24x128xf32> to vector<8x10xf32>
    %49 = arith.addf %47, %48 : vector<8x10xf32>
    %50 = vector.broadcast %0 : f32 to vector<8x10xf32>
    %51 = arith.addf %49, %50 : vector<8x10xf32>
    %c1_24 = arith.constant 1 : index
    %c0_25 = arith.constant 0 : index
    %c0_26 = arith.constant 0 : index
    %c0_27 = arith.constant 0 : index
    %52 = vector.load %arg5[%c1_24, %c0_25, %c0_26, %c0_27] : memref<2x1x8x10xf32, #tpu.memory_space<vmem>>, vector<1x1x8x10xf32>
    %53 = vector.shape_cast %52 : vector<1x1x8x10xf32> to vector<8x10xf32>
    %54 = vector.shape_cast %51 : vector<8x10xf32> to vector<1x1x8x10xf32>
    tpu.vector_store %arg5[%c1_24, %c0_25, %c0_26, %c0_27], %54 {strides = array<i32>} : memref<2x1x8x10xf32, #tpu.memory_space<vmem>>, vector<1x1x8x10xf32>,
    return
  }
  func.func @transform_0(%arg0: i32) -> (i32, i32, i32, i32) {
    %c0_i32 = arith.constant 0 : i32
    %c0_i32_0 = arith.constant 0 : i32
    %c0_i32_1 = arith.constant 0 : i32
    %c0_i32_2 = arith.constant 0 : i32
    return %arg0, %c0_i32, %c0_i32_0, %c0_i32_1 : i32, i32, i32, i32
  }
  func.func @transform_1(%arg0: i32) -> (i32, i32) {
    %c0_i32 = arith.constant 0 : i32
    %c0_i32_0 = arith.constant 0 : i32
    %c0_i32_1 = arith.constant 0 : i32
    return %c0_i32, %c0_i32_0 : i32, i32
  }
  func.func @transform_2(%arg0: i32) -> (i32, i32) {
    %c0_i32 = arith.constant 0 : i32
    %c0_i32_0 = arith.constant 0 : i32
    %c0_i32_1 = arith.constant 0 : i32
    return %c0_i32, %c0_i32_0 : i32, i32
  }
  func.func @transform_3(%arg0: i32) -> i32 {
    %c0_i32 = arith.constant 0 : i32
    %c0_i32_0 = arith.constant 0 : i32
    return %c0_i32 : i32
  }
  func.func @transform_4(%arg0: i32) -> (i32, i32, i32, i32) {
    %c0_i32 = arith.constant 0 : i32
    %c0_i32_0 = arith.constant 0 : i32
    %c0_i32_1 = arith.constant 0 : i32
    %c0_i32_2 = arith.constant 0 : i32
    return %arg0, %c0_i32, %c0_i32_0, %c0_i32_1 : i32, i32, i32, i32
  }
}

</mosaic_0001>

<llo_original>
// kernel: conv_example_forward.1
$region0: #{conv_example_forward.1}
  #allocation0 [shape = 'u32[]', space=smem, size = 0x4, offset = 0x4, fixed_abs, tag = 'smem constant byte address 0x4 - core index']
  #allocation1 [shape = 'u32[144,128]{1,0:T(1,128)}', space=vmem, size = 0x12000, scoped, tag = 'internal scratch']
  #allocation2 [shape = 'f32[1]{0:T(128)S(6)}', space=smem, size = 0x200, scoped, tag = 'scoped memory for conv_example_forward.1']
  %s0 = inlined_call_operand.vmem [shape: f32[2,1,24,256], index: 0, kind: input, shape index: {}]
  %s1 = inlined_call_operand.vmem [shape: bf16[256,128], index: 1, kind: input, shape index: {}]
  %s2 = inlined_call_operand.vmem [shape: bf16[256,128], index: 2, kind: input, shape index: {}]
  %s3 = inlined_call_operand.<no memory space> [shape: f32[1], index: 3, kind: input, shape index: {}]
  %s4 = inlined_call_operand.hbm [shape: f32[2,1,8,10], index: 4, kind: output, shape index: {}]
  %s5 = sld [smem:[#allocation0]]
  $region26: #{conv_example_forward.1} parent=0
    _
  %s7 = ssub.s32 1, %s5
  %s8 = scalar_select 0, %s7, %s5
  %9 = sst [smem:[#allocation2]] %s3
  $region1: #{conv_example_forward.1} parent=0
    #allocation3 [shape = 'u8[8192]{0}', space=vmem, size = 0x2000, scoped, tag = 'output window, operand 0, single buffered']
    #allocation4 [shape = 's32[1]{0}', space=sflag, size = 0x4, scoped, tag = 'scoped memory for conv_example_forward.1']
    %10 = vsyncpa [#allocation4], 0
    // Predicated region
    $region2: #{conv_example_forward.1} parent=1 // pred_check
      _
    $region3: #{conv_example_forward.1} parent=1 // pred_check_branch
      %12 = sbr.rel (0) target = $region5
    $region4: #{conv_example_forward.1} parent=1 // pred_region
      _
    $region5: #{conv_example_forward.1} parent=1 // pred_fallthru
      _
    // Predicated region
    $region6: #{conv_example_forward.1} parent=1 // pred_check
      _
    $region7: #{conv_example_forward.1} parent=1 // pred_check_branch
      %14 = sbr.rel (0) target = $region9
    $region8: #{conv_example_forward.1} parent=1 // pred_region
      _
    $region9: #{conv_example_forward.1} parent=1 // pred_fallthru
      _
    // Predicated region
    $region10: #{conv_example_forward.1} parent=1 // pred_check
      _
    $region11: #{conv_example_forward.1} parent=1 // pred_check_branch
      %16 = sbr.rel (0) target = $region13
    $region12: #{conv_example_forward.1} parent=1 // pred_region
      _
    $region13: #{conv_example_forward.1} parent=1 // pred_fallthru
      _
    // Predicated region
    $region14: #{conv_example_forward.1} parent=1 // pred_check
      _
    $region15: #{conv_example_forward.1} parent=1 // pred_check_branch
      %18 = sbr.rel (0) target = $region17
    $region16: #{conv_example_forward.1} parent=1 // pred_region
      _
    $region17: #{conv_example_forward.1} parent=1 // pred_fallthru
      _
    %s20 = sld [smem:[#allocation2]]
    %v21 = vld [vmem:[%s0] sm:$0xff]
    %v22 = vld [vmem:[%s0 + $0x8] sm:$0xff]
    %v23 = vld [vmem:[%s0 + $0x10] sm:$0xff]
    %v24 = vld [vmem:[%s0 + $0x18] sm:$0xff]
    %v25 = vld [vmem:[%s0 + $0x20] sm:$0xff]
    %v26 = vld [vmem:[%s0 + $0x28] sm:$0xff]
    %v27 = vpack.c.bf16 %v23, %v21
    %v28 = vpack.c.bf16 %v24, %v22
    %v29 = vpack.c.bf16 %v25, %v25
    %v30 = vpack.c.bf16 %v26, %v26
    %v31 = vunpack.c.l.bf16 %v27
    %v32 = vunpack.c.l.bf16 %v28
    %v33 = vunpack.c.h.bf16 %v27
    %v34 = vunpack.c.h.bf16 %v28
    %v35 = vunpack.c.l.bf16 %v29
    %v36 = vunpack.c.l.bf16 %v30
    %v37 = vsub.f32 %v21, %v31
    %v38 = vsub.f32 %v22, %v32
    %v39 = vsub.f32 %v23, %v33
    %v40 = vsub.f32 %v24, %v34
    %v41 = vsub.f32 %v25, %v35
    %v42 = vsub.f32 %v26, %v36
    %v43 = vpack.c.bf16 %v39, %v37
    %v44 = vpack.c.bf16 %v40, %v38
    %v45 = vpack.c.bf16 %v41, %v41
    %v46 = vpack.c.bf16 %v42, %v42
    %v47 = vld [vmem:[%s1] sm:$0xf]
    %v48 = vld [vmem:[%s1 + $0x4] sm:$0xf]
    %v49 = vld [vmem:[%s1 + $0x8] sm:$0xf]
    %v50 = vld [vmem:[%s1 + $0xc] sm:$0xf]
    %v51 = vld [vmem:[%s1 + $0x10] sm:$0xf]
    %v52 = vld [vmem:[%s1 + $0x14] sm:$0xf]
    %v53 = vld [vmem:[%s1 + $0x18] sm:$0xf]
    %v54 = vld [vmem:[%s1 + $0x1c] sm:$0xf]
    %v55 = vld [vmem:[%s1 + $0x20] sm:$0xf]
    %v56 = vld [vmem:[%s1 + $0x24] sm:$0xf]
    %v57 = vld [vmem:[%s1 + $0x28] sm:$0xf]
    %v58 = vld [vmem:[%s1 + $0x2c] sm:$0xf]
    %v59 = vld [vmem:[%s1 + $0x30] sm:$0xf]
    %v60 = vld [vmem:[%s1 + $0x34] sm:$0xf]
    %v61 = vld [vmem:[%s1 + $0x38] sm:$0xf]
    %v62 = vld [vmem:[%s1 + $0x3c] sm:$0xf]
    %v63 = vld [vmem:[%s1 + $0x40] sm:$0xf]
    %v64 = vld [vmem:[%s1 + $0x44] sm:$0xf]
    %v65 = vld [vmem:[%s1 + $0x48] sm:$0xf]
    %v66 = vld [vmem:[%s1 + $0x4c] sm:$0xf]
    %v67 = vld [vmem:[%s1 + $0x50] sm:$0xf]
    %v68 = vld [vmem:[%s1 + $0x54] sm:$0xf]
    %v69 = vld [vmem:[%s1 + $0x58] sm:$0xf]
    %v70 = vld [vmem:[%s1 + $0x5c] sm:$0xf]
    %v71 = vld [vmem:[%s1 + $0x60] sm:$0xf]
    %v72 = vld [vmem:[%s1 + $0x64] sm:$0xf]
    %v73 = vld [vmem:[%s1 + $0x68] sm:$0xf]
    %v74 = vld [vmem:[%s1 + $0x6c] sm:$0xf]
    %v75 = vld [vmem:[%s1 + $0x70] sm:$0xf]
    %v76 = vld [vmem:[%s1 + $0x74] sm:$0xf]
    %v77 = vld [vmem:[%s1 + $0x78] sm:$0xf]
    %v78 = vld [vmem:[%s1 + $0x7c] sm:$0xf]
    %v79 = vld [vmem:[%s2] sm:$0xf]
    %v80 = vld [vmem:[%s2 + $0x4] sm:$0xf]
    %v81 = vld [vmem:[%s2 + $0x8] sm:$0xf]
    %v82 = vld [vmem:[%s2 + $0xc] sm:$0xf]
    %v83 = vld [vmem:[%s2 + $0x10] sm:$0xf]
    %v84 = vld [vmem:[%s2 + $0x14] sm:$0xf]
    %v85 = vld [vmem:[%s2 + $0x18] sm:$0xf]
    %v86 = vld [vmem:[%s2 + $0x1c] sm:$0xf]
    %v87 = vld [vmem:[%s2 + $0x20] sm:$0xf]
    %v88 = vld [vmem:[%s2 + $0x24] sm:$0xf]
    %v89 = vld [vmem:[%s2 + $0x28] sm:$0xf]
    %v90 = vld [vmem:[%s2 + $0x2c] sm:$0xf]
    %v91 = vld [vmem:[%s2 + $0x30] sm:$0xf]
    %v92 = vld [vmem:[%s2 + $0x34] sm:$0xf]
    %v93 = vld [vmem:[%s2 + $0x38] sm:$0xf]
    %v94 = vld [vmem:[%s2 + $0x3c] sm:$0xf]
    %v95 = vld [vmem:[%s2 + $0x40] sm:$0xf]
    %v96 = vld [vmem:[%s2 + $0x44] sm:$0xf]
    %v97 = vld [vmem:[%s2 + $0x48] sm:$0xf]
    %v98 = vld [vmem:[%s2 + $0x4c] sm:$0xf]
    %v99 = vld [vmem:[%s2 + $0x50] sm:$0xf]
    %v100 = vld [vmem:[%s2 + $0x54] sm:$0xf]
    %v101 = vld [vmem:[%s2 + $0x58] sm:$0xf]
    %v102 = vld [vmem:[%s2 + $0x5c] sm:$0xf]
    %v103 = vld [vmem:[%s2 + $0x60] sm:$0xf]
    %v104 = vld [vmem:[%s2 + $0x64] sm:$0xf]
    %v105 = vld [vmem:[%s2 + $0x68] sm:$0xf]
    %v106 = vld [vmem:[%s2 + $0x6c] sm:$0xf]
    %v107 = vld [vmem:[%s2 + $0x70] sm:$0xf]
    %v108 = vld [vmem:[%s2 + $0x74] sm:$0xf]
    %v109 = vld [vmem:[%s2 + $0x78] sm:$0xf]
    %v110 = vld [vmem:[%s2 + $0x7c] sm:$0xf]
    %v143 = vunpack.c.l.b16 %v47
    %v144 = vunpack.c.l.b16 %v48
    %v145 = vunpack.c.l.b16 %v49
    %v146 = vunpack.c.l.b16 %v50
    %v147 = vunpack.c.l.b16 %v51
    %v148 = vunpack.c.l.b16 %v52
    %v149 = vunpack.c.l.b16 %v53
    %v150 = vunpack.c.l.b16 %v54
    %v151 = vunpack.c.l.b16 %v55
    %v152 = vunpack.c.l.b16 %v56
    %v153 = vunpack.c.l.b16 %v57
    %v154 = vunpack.c.l.b16 %v58
    %v155 = vunpack.c.l.b16 %v59
    %v156 = vunpack.c.l.b16 %v60
    %v157 = vunpack.c.l.b16 %v61
    %v158 = vunpack.c.l.b16 %v62
    %v159 = vunpack.c.l.b16 %v63
    %v160 = vunpack.c.l.b16 %v64
    %v161 = vunpack.c.l.b16 %v65
    %v162 = vunpack.c.l.b16 %v66
    %v163 = vunpack.c.l.b16 %v67
    %v164 = vunpack.c.l.b16 %v68
    %v165 = vunpack.c.l.b16 %v69
    %v166 = vunpack.c.l.b16 %v70
    %v167 = vunpack.c.l.b16 %v71
    %v168 = vunpack.c.l.b16 %v72
    %v169 = vunpack.c.l.b16 %v73
    %v170 = vunpack.c.l.b16 %v74
    %v171 = vunpack.c.l.b16 %v75
    %v172 = vunpack.c.l.b16 %v76
    %v173 = vunpack.c.l.b16 %v77
    %v174 = vunpack.c.l.b16 %v78
    %v175 = vpack.c.b16 %v144, %v143
    %v176 = vpack.c.b16 %v146, %v145
    %v177 = vpack.c.b16 %v148, %v147
    %v178 = vpack.c.b16 %v150, %v149
    %v179 = vpack.c.b16 %v152, %v151
    %v180 = vpack.c.b16 %v154, %v153
    %v181 = vpack.c.b16 %v156, %v155
    %v182 = vpack.c.b16 %v158, %v157
    %v183 = vpack.c.b16 %v160, %v159
    %v184 = vpack.c.b16 %v162, %v161
    %v185 = vpack.c.b16 %v164, %v163
    %v186 = vpack.c.b16 %v166, %v165
    %v187 = vpack.c.b16 %v168, %v167
    %v188 = vpack.c.b16 %v170, %v169
    %v189 = vpack.c.b16 %v172, %v171
    %v190 = vpack.c.b16 %v174, %v173
    %207 = vmatprep.subr.bf16.mxu0 0
    %208 = vmatpush1.bf16.msra.mxu0 %v182
    %209 = vmatprep.subr.bf16.mxu0 0
    %210 = vmatpush1.bf16.msra.mxu0 %v181
    %211 = vmatprep.subr.bf16.mxu0 0
    %212 = vmatpush1.bf16.msra.mxu0 %v180
    %213 = vmatprep.subr.bf16.mxu0 0
    %214 = vmatpush1.bf16.msra.mxu0 %v179
    %215 = vmatprep.subr.bf16.mxu0 0
    %216 = vmatpush1.bf16.msra.mxu0 %v178
    %217 = vmatprep.subr.bf16.mxu0 0
    %218 = vmatpush1.bf16.msra.mxu0 %v177
    %219 = vmatprep.subr.bf16.mxu0 0
    %220 = vmatpush1.bf16.msra.mxu0 %v176
    %221 = vmatprep.subr.bf16.mxu0 0
    %222 = vmatpush1.bf16.msra.mxu0 %v175
    %223 = vmatprep.subr.bf16.mxu0 0
    %224 = vmatpush2.bf16.msra.mxu0 %v190
    %225 = vmatprep.subr.bf16.mxu0 0
    %226 = vmatpush2.bf16.msra.mxu0 %v189
    %227 = vmatprep.subr.bf16.mxu0 0
    %228 = vmatpush2.bf16.msra.mxu0 %v188
    %229 = vmatprep.subr.bf16.mxu0 0
    %230 = vmatpush2.bf16.msra.mxu0 %v187
    %231 = vmatprep.subr.bf16.mxu0 0
    %232 = vmatpush2.bf16.msra.mxu0 %v186
    %233 = vmatprep.subr.bf16.mxu0 0
    %234 = vmatpush2.bf16.msra.mxu0 %v185
    %235 = vmatprep.subr.bf16.mxu0 0
    %236 = vmatpush2.bf16.msra.mxu0 %v184
    %237 = vmatprep.subr.bf16.mxu0 0
    %238 = vmatpush2.bf16.msra.mxu0 %v183
    %239 = vmatprep.mubr.bf16.mxu0 %v44
    %240 = vmatmul.mubr.bf16.gmra.mxu0 %v43
    %v241 = vpop.f32.mrf.mxu0
    %v242 = vadd.f32 0.0, %v241
    %v243 = vpop.f32.mrf.mxu0
    %v244 = vpop.f32.mrf.mxu0
    %v245 = vadd.f32 0.0, %v244
    %v246 = vpop.f32.mrf.mxu0
    %247 = vmatprep.mubr.bf16.mxu0 %v46
    %248 = vmatmul.mubr.bf16.gmra.mxu0 %v45
    %v249 = vpop.f32.mrf.mxu0
    %v250 = vadd.f32 0.0, %v249
    %v251 = vpop.f32.mrf.mxu0
    %v252 = vpop.f32.mrf.mxu0
    %v253 = vpop.f32.mrf.mxu0
    %254 = vdwg.mxu0
    %255 = vmatprep.subr.bf16.mxu0 0
    %256 = vmatpush1.bf16.msra.mxu0 %v182
    %257 = vmatprep.subr.bf16.mxu0 0
    %258 = vmatpush1.bf16.msra.mxu0 %v181
    %259 = vmatprep.subr.bf16.mxu0 0
    %260 = vmatpush1.bf16.msra.mxu0 %v180
    %261 = vmatprep.subr.bf16.mxu0 0
    %262 = vmatpush1.bf16.msra.mxu0 %v179
    %263 = vmatprep.subr.bf16.mxu0 0
    %264 = vmatpush1.bf16.msra.mxu0 %v178
    %265 = vmatprep.subr.bf16.mxu0 0
    %266 = vmatpush1.bf16.msra.mxu0 %v177
    %267 = vmatprep.subr.bf16.mxu0 0
    %268 = vmatpush1.bf16.msra.mxu0 %v176
    %269 = vmatprep.subr.bf16.mxu0 0
    %270 = vmatpush1.bf16.msra.mxu0 %v175
    %271 = vmatprep.subr.bf16.mxu0 0
    %272 = vmatpush2.bf16.msra.mxu0 %v190
    %273 = vmatprep.subr.bf16.mxu0 0
    %274 = vmatpush2.bf16.msra.mxu0 %v189
    %275 = vmatprep.subr.bf16.mxu0 0
    %276 = vmatpush2.bf16.msra.mxu0 %v188
    %277 = vmatprep.subr.bf16.mxu0 0
    %278 = vmatpush2.bf16.msra.mxu0 %v187
    %279 = vmatprep.subr.bf16.mxu0 0
    %280 = vmatpush2.bf16.msra.mxu0 %v186
    %281 = vmatprep.subr.bf16.mxu0 0
    %282 = vmatpush2.bf16.msra.mxu0 %v185
    %283 = vmatprep.subr.bf16.mxu0 0
    %284 = vmatpush2.bf16.msra.mxu0 %v184
    %285 = vmatprep.subr.bf16.mxu0 0
    %286 = vmatpush2.bf16.msra.mxu0 %v183
    %287 = vmatprep.mubr.bf16.mxu0 %v28
    %288 = vmatmul.mubr.bf16.gmra.mxu0 %v27
    %v289 = vpop.f32.mrf.mxu0
    %v290 = vadd.f32 %v242, %v289
    %v291 = vpop.f32.mrf.mxu0
    %v292 = vpop.f32.mrf.mxu0
    %v293 = vadd.f32 %v245, %v292
    %v294 = vpop.f32.mrf.mxu0
    %295 = vmatprep.mubr.bf16.mxu0 %v30
    %296 = vmatmul.mubr.bf16.gmra.mxu0 %v29
    %v297 = vpop.f32.mrf.mxu0
    %v298 = vadd.f32 %v250, %v297
    %v299 = vpop.f32.mrf.mxu0
    %v300 = vpop.f32.mrf.mxu0
    %v301 = vpop.f32.mrf.mxu0
    %302 = vdwg.mxu0
    %v335 = vunpack.c.l.b16 %v79
    %v336 = vunpack.c.l.b16 %v80
    %v337 = vunpack.c.l.b16 %v81
    %v338 = vunpack.c.l.b16 %v82
    %v339 = vunpack.c.l.b16 %v83
    %v340 = vunpack.c.l.b16 %v84
    %v341 = vunpack.c.l.b16 %v85
    %v342 = vunpack.c.l.b16 %v86
    %v343 = vunpack.c.l.b16 %v87
    %v344 = vunpack.c.l.b16 %v88
    %v345 = vunpack.c.l.b16 %v89
    %v346 = vunpack.c.l.b16 %v90
    %v347 = vunpack.c.l.b16 %v91
    %v348 = vunpack.c.l.b16 %v92
    %v349 = vunpack.c.l.b16 %v93
    %v350 = vunpack.c.l.b16 %v94
    %v351 = vunpack.c.l.b16 %v95
    %v352 = vunpack.c.l.b16 %v96
    %v353 = vunpack.c.l.b16 %v97
    %v354 = vunpack.c.l.b16 %v98
    %v355 = vunpack.c.l.b16 %v99
    %v356 = vunpack.c.l.b16 %v100
    %v357 = vunpack.c.l.b16 %v101
    %v358 = vunpack.c.l.b16 %v102
    %v359 = vunpack.c.l.b16 %v103
    %v360 = vunpack.c.l.b16 %v104
    %v361 = vunpack.c.l.b16 %v105
    %v362 = vunpack.c.l.b16 %v106
    %v363 = vunpack.c.l.b16 %v107
    %v364 = vunpack.c.l.b16 %v108
    %v365 = vunpack.c.l.b16 %v109
    %v366 = vunpack.c.l.b16 %v110
    %v367 = vpack.c.b16 %v336, %v335
    %v368 = vpack.c.b16 %v338, %v337
    %v369 = vpack.c.b16 %v340, %v339
    %v370 = vpack.c.b16 %v342, %v341
    %v371 = vpack.c.b16 %v344, %v343
    %v372 = vpack.c.b16 %v346, %v345
    %v373 = vpack.c.b16 %v348, %v347
    %v374 = vpack.c.b16 %v350, %v349
    %v375 = vpack.c.b16 %v352, %v351
    %v376 = vpack.c.b16 %v354, %v353
    %v377 = vpack.c.b16 %v356, %v355
    %v378 = vpack.c.b16 %v358, %v357
    %v379 = vpack.c.b16 %v360, %v359
    %v380 = vpack.c.b16 %v362, %v361
    %v381 = vpack.c.b16 %v364, %v363
    %v382 = vpack.c.b16 %v366, %v365
    %399 = vmatprep.subr.bf16.mxu0 0
    %400 = vmatpush1.bf16.msra.mxu0 %v374
    %401 = vmatprep.subr.bf16.mxu0 0
    %402 = vmatpush1.bf16.msra.mxu0 %v373
    %403 = vmatprep.subr.bf16.mxu0 0
    %404 = vmatpush1.bf16.msra.mxu0 %v372
    %405 = vmatprep.subr.bf16.mxu0 0
    %406 = vmatpush1.bf16.msra.mxu0 %v371
    %407 = vmatprep.subr.bf16.mxu0 0
    %408 = vmatpush1.bf16.msra.mxu0 %v370
    %409 = vmatprep.subr.bf16.mxu0 0
    %410 = vmatpush1.bf16.msra.mxu0 %v369
    %411 = vmatprep.subr.bf16.mxu0 0
    %412 = vmatpush1.bf16.msra.mxu0 %v368
    %413 = vmatprep.subr.bf16.mxu0 0
    %414 = vmatpush1.bf16.msra.mxu0 %v367
    %415 = vmatprep.subr.bf16.mxu0 0
    %416 = vmatpush2.bf16.msra.mxu0 %v382
    %417 = vmatprep.subr.bf16.mxu0 0
    %418 = vmatpush2.bf16.msra.mxu0 %v381
    %419 = vmatprep.subr.bf16.mxu0 0
    %420 = vmatpush2.bf16.msra.mxu0 %v380
    %421 = vmatprep.subr.bf16.mxu0 0
    %422 = vmatpush2.bf16.msra.mxu0 %v379
    %423 = vmatprep.subr.bf16.mxu0 0
    %424 = vmatpush2.bf16.msra.mxu0 %v378
    %425 = vmatprep.subr.bf16.mxu0 0
    %426 = vmatpush2.bf16.msra.mxu0 %v377
    %427 = vmatprep.subr.bf16.mxu0 0
    %428 = vmatpush2.bf16.msra.mxu0 %v376
    %429 = vmatprep.subr.bf16.mxu0 0
    %430 = vmatpush2.bf16.msra.mxu0 %v375
    %431 = vmatprep.mubr.bf16.mxu0 %v28
    %432 = vmatmul.mubr.bf16.gmra.mxu0 %v27
    %v433 = vpop.f32.mrf.mxu0
    %v434 = vadd.f32 0.0, %v433
    %v435 = vpop.f32.mrf.mxu0
    %v436 = vpop.f32.mrf.mxu0
    %v437 = vadd.f32 0.0, %v436
    %v438 = vpop.f32.mrf.mxu0
    %439 = vmatprep.mubr.bf16.mxu0 %v30
    %440 = vmatmul.mubr.bf16.gmra.mxu0 %v29
    %v441 = vpop.f32.mrf.mxu0
    %v442 = vadd.f32 0.0, %v441
    %v443 = vpop.f32.mrf.mxu0
    %v444 = vpop.f32.mrf.mxu0
    %v445 = vpop.f32.mrf.mxu0
    %446 = vdwg.mxu0
    %v447 = vadd.f32 %v290, %v434
    %v448 = vadd.f32 %v293, %v437
    %v449 = vadd.f32 %v298, %v442
    %vm452 = vcmask 1043456
    %v453 = vrot.slane %v447, 4
    %v454 = vrot.slane %v448, 4
    %v455 = vsel %vm452, %v453, %v454
    %456 = vrot.lane.b32.xlu0 %v455, 118
    %v457 = vpop.permute.xlu0 %456
    %v459 = vadd.f32 %v447, %v457
    %460 = vrot.lane.b32.xlu0 %v448, 108
    %v461 = vpop.permute.xlu0 %460
    %v463 = vadd.f32 %v459, %v461
    %v465 = vrot.slane %v449, 4
    %v466 = vsel %vm452, %v454, %v465
    %467 = vrot.lane.b32.xlu0 %v466, 98
    %v468 = vpop.permute.xlu0 %467
    %v470 = vadd.f32 %v463, %v468
    %471 = vrot.lane.b32.xlu0 %v449, 88
    %v472 = vpop.permute.xlu0 %471
    %v474 = vadd.f32 %v470, %v472
    %v475 = vstv %s20
    %v476 = vadd.f32 %v474, %v475
    %vm477 = vcmask 80896
    %478 = vst.msk [vmem:[#allocation3] sm:$0xff] %vm477, %v476
    %s479 = scalar_lea.vmem %s0, 48
    %v480 = vld [vmem:[%s479] sm:$0xff]
    %v481 = vld [vmem:[%s479 + $0x8] sm:$0xff]
    %v482 = vld [vmem:[%s479 + $0x10] sm:$0xff]
    %v483 = vld [vmem:[%s479 + $0x18] sm:$0xff]
    %v484 = vld [vmem:[%s479 + $0x20] sm:$0xff]
    %v485 = vld [vmem:[%s479 + $0x28] sm:$0xff]
    %v486 = vpack.c.bf16 %v482, %v480
    %v487 = vpack.c.bf16 %v483, %v481
    %v488 = vpack.c.bf16 %v484, %v484
    %v489 = vpack.c.bf16 %v485, %v485
    %v490 = vunpack.c.l.bf16 %v486
    %v491 = vunpack.c.l.bf16 %v487
    %v492 = vunpack.c.h.bf16 %v486
    %v493 = vunpack.c.h.bf16 %v487
    %v494 = vunpack.c.l.bf16 %v488
    %v495 = vunpack.c.l.bf16 %v489
    %v496 = vsub.f32 %v480, %v490
    %v497 = vsub.f32 %v481, %v491
    %v498 = vsub.f32 %v482, %v492
    %v499 = vsub.f32 %v483, %v493
    %v500 = vsub.f32 %v484, %v494
    %v501 = vsub.f32 %v485, %v495
    %v502 = vpack.c.bf16 %v498, %v496
    %v503 = vpack.c.bf16 %v499, %v497
    %v504 = vpack.c.bf16 %v500, %v500
    %v505 = vpack.c.bf16 %v501, %v501
    %v506 = vld [vmem:[%s1] sm:$0xf]
    %v507 = vld [vmem:[%s1 + $0x4] sm:$0xf]
    %v508 = vld [vmem:[%s1 + $0x8] sm:$0xf]
    %v509 = vld [vmem:[%s1 + $0xc] sm:$0xf]
    %v510 = vld [vmem:[%s1 + $0x10] sm:$0xf]
    %v511 = vld [vmem:[%s1 + $0x14] sm:$0xf]
    %v512 = vld [vmem:[%s1 + $0x18] sm:$0xf]
    %v513 = vld [vmem:[%s1 + $0x1c] sm:$0xf]
    %v514 = vld [vmem:[%s1 + $0x20] sm:$0xf]
    %v515 = vld [vmem:[%s1 + $0x24] sm:$0xf]
    %v516 = vld [vmem:[%s1 + $0x28] sm:$0xf]
    %v517 = vld [vmem:[%s1 + $0x2c] sm:$0xf]
    %v518 = vld [vmem:[%s1 + $0x30] sm:$0xf]
    %v519 = vld [vmem:[%s1 + $0x34] sm:$0xf]
    %v520 = vld [vmem:[%s1 + $0x38] sm:$0xf]
    %v521 = vld [vmem:[%s1 + $0x3c] sm:$0xf]
    %v522 = vld [vmem:[%s1 + $0x40] sm:$0xf]
    %v523 = vld [vmem:[%s1 + $0x44] sm:$0xf]
    %v524 = vld [vmem:[%s1 + $0x48] sm:$0xf]
    %v525 = vld [vmem:[%s1 + $0x4c] sm:$0xf]
    %v526 = vld [vmem:[%s1 + $0x50] sm:$0xf]
    %v527 = vld [vmem:[%s1 + $0x54] sm:$0xf]
    %v528 = vld [vmem:[%s1 + $0x58] sm:$0xf]
    %v529 = vld [vmem:[%s1 + $0x5c] sm:$0xf]
    %v530 = vld [vmem:[%s1 + $0x60] sm:$0xf]
    %v531 = vld [vmem:[%s1 + $0x64] sm:$0xf]
    %v532 = vld [vmem:[%s1 + $0x68] sm:$0xf]
    %v533 = vld [vmem:[%s1 + $0x6c] sm:$0xf]
    %v534 = vld [vmem:[%s1 + $0x70] sm:$0xf]
    %v535 = vld [vmem:[%s1 + $0x74] sm:$0xf]
    %v536 = vld [vmem:[%s1 + $0x78] sm:$0xf]
    %v537 = vld [vmem:[%s1 + $0x7c] sm:$0xf]
    %v538 = vld [vmem:[%s2] sm:$0xf]
    %v539 = vld [vmem:[%s2 + $0x4] sm:$0xf]
    %v540 = vld [vmem:[%s2 + $0x8] sm:$0xf]
    %v541 = vld [vmem:[%s2 + $0xc] sm:$0xf]
    %v542 = vld [vmem:[%s2 + $0x10] sm:$0xf]
    %v543 = vld [vmem:[%s2 + $0x14] sm:$0xf]
    %v544 = vld [vmem:[%s2 + $0x18] sm:$0xf]
    %v545 = vld [vmem:[%s2 + $0x1c] sm:$0xf]
    %v546 = vld [vmem:[%s2 + $0x20] sm:$0xf]
    %v547 = vld [vmem:[%s2 + $0x24] sm:$0xf]
    %v548 = vld [vmem:[%s2 + $0x28] sm:$0xf]
    %v549 = vld [vmem:[%s2 + $0x2c] sm:$0xf]
    %v550 = vld [vmem:[%s2 + $0x30] sm:$0xf]
    %v551 = vld [vmem:[%s2 + $0x34] sm:$0xf]
    %v552 = vld [vmem:[%s2 + $0x38] sm:$0xf]
    %v553 = vld [vmem:[%s2 + $0x3c] sm:$0xf]
    %v554 = vld [vmem:[%s2 + $0x40] sm:$0xf]
    %v555 = vld [vmem:[%s2 + $0x44] sm:$0xf]
    %v556 = vld [vmem:[%s2 + $0x48] sm:$0xf]
    %v557 = vld [vmem:[%s2 + $0x4c] sm:$0xf]
    %v558 = vld [vmem:[%s2 + $0x50] sm:$0xf]
    %v559 = vld [vmem:[%s2 + $0x54] sm:$0xf]
    %v560 = vld [vmem:[%s2 + $0x58] sm:$0xf]
    %v561 = vld [vmem:[%s2 + $0x5c] sm:$0xf]
    %v562 = vld [vmem:[%s2 + $0x60] sm:$0xf]
    %v563 = vld [vmem:[%s2 + $0x64] sm:$0xf]
    %v564 = vld [vmem:[%s2 + $0x68] sm:$0xf]
    %v565 = vld [vmem:[%s2 + $0x6c] sm:$0xf]
    %v566 = vld [vmem:[%s2 + $0x70] sm:$0xf]
    %v567 = vld [vmem:[%s2 + $0x74] sm:$0xf]
    %v568 = vld [vmem:[%s2 + $0x78] sm:$0xf]
    %v569 = vld [vmem:[%s2 + $0x7c] sm:$0xf]
    %v602 = vunpack.c.l.b16 %v506
    %v603 = vunpack.c.l.b16 %v507
    %v604 = vunpack.c.l.b16 %v508
    %v605 = vunpack.c.l.b16 %v509
    %v606 = vunpack.c.l.b16 %v510
    %v607 = vunpack.c.l.b16 %v511
    %v608 = vunpack.c.l.b16 %v512
    %v609 = vunpack.c.l.b16 %v513
    %v610 = vunpack.c.l.b16 %v514
    %v611 = vunpack.c.l.b16 %v515
    %v612 = vunpack.c.l.b16 %v516
    %v613 = vunpack.c.l.b16 %v517
    %v614 = vunpack.c.l.b16 %v518
    %v615 = vunpack.c.l.b16 %v519
    %v616 = vunpack.c.l.b16 %v520
    %v617 = vunpack.c.l.b16 %v521
    %v618 = vunpack.c.l.b16 %v522
    %v619 = vunpack.c.l.b16 %v523
    %v620 = vunpack.c.l.b16 %v524
    %v621 = vunpack.c.l.b16 %v525
    %v622 = vunpack.c.l.b16 %v526
    %v623 = vunpack.c.l.b16 %v527
    %v624 = vunpack.c.l.b16 %v528
    %v625 = vunpack.c.l.b16 %v529
    %v626 = vunpack.c.l.b16 %v530
    %v627 = vunpack.c.l.b16 %v531
    %v628 = vunpack.c.l.b16 %v532
    %v629 = vunpack.c.l.b16 %v533
    %v630 = vunpack.c.l.b16 %v534
    %v631 = vunpack.c.l.b16 %v535
    %v632 = vunpack.c.l.b16 %v536
    %v633 = vunpack.c.l.b16 %v537
    %v634 = vpack.c.b16 %v603, %v602
    %v635 = vpack.c.b16 %v605, %v604
    %v636 = vpack.c.b16 %v607, %v606
    %v637 = vpack.c.b16 %v609, %v608
    %v638 = vpack.c.b16 %v611, %v610
    %v639 = vpack.c.b16 %v613, %v612
    %v640 = vpack.c.b16 %v615, %v614
    %v641 = vpack.c.b16 %v617, %v616
    %v642 = vpack.c.b16 %v619, %v618
    %v643 = vpack.c.b16 %v621, %v620
    %v644 = vpack.c.b16 %v623, %v622
    %v645 = vpack.c.b16 %v625, %v624
    %v646 = vpack.c.b16 %v627, %v626
    %v647 = vpack.c.b16 %v629, %v628
    %v648 = vpack.c.b16 %v631, %v630
    %v649 = vpack.c.b16 %v633, %v632
    %666 = vmatprep.subr.bf16.mxu0 0
    %667 = vmatpush1.bf16.msra.mxu0 %v641
    %668 = vmatprep.subr.bf16.mxu0 0
    %669 = vmatpush1.bf16.msra.mxu0 %v640
    %670 = vmatprep.subr.bf16.mxu0 0
    %671 = vmatpush1.bf16.msra.mxu0 %v639
    %672 = vmatprep.subr.bf16.mxu0 0
    %673 = vmatpush1.bf16.msra.mxu0 %v638
    %674 = vmatprep.subr.bf16.mxu0 0
    %675 = vmatpush1.bf16.msra.mxu0 %v637
    %676 = vmatprep.subr.bf16.mxu0 0
    %677 = vmatpush1.bf16.msra.mxu0 %v636
    %678 = vmatprep.subr.bf16.mxu0 0
    %679 = vmatpush1.bf16.msra.mxu0 %v635
    %680 = vmatprep.subr.bf16.mxu0 0
    %681 = vmatpush1.bf16.msra.mxu0 %v634
    %682 = vmatprep.subr.bf16.mxu0 0
    %683 = vmatpush2.bf16.msra.mxu0 %v649
    %684 = vmatprep.subr.bf16.mxu0 0
    %685 = vmatpush2.bf16.msra.mxu0 %v648
    %686 = vmatprep.subr.bf16.mxu0 0
    %687 = vmatpush2.bf16.msra.mxu0 %v647
    %688 = vmatprep.subr.bf16.mxu0 0
    %689 = vmatpush2.bf16.msra.mxu0 %v646
    %690 = vmatprep.subr.bf16.mxu0 0
    %691 = vmatpush2.bf16.msra.mxu0 %v645
    %692 = vmatprep.subr.bf16.mxu0 0
    %693 = vmatpush2.bf16.msra.mxu0 %v644
    %694 = vmatprep.subr.bf16.mxu0 0
    %695 = vmatpush2.bf16.msra.mxu0 %v643
    %696 = vmatprep.subr.bf16.mxu0 0
    %697 = vmatpush2.bf16.msra.mxu0 %v642
    %698 = vmatprep.mubr.bf16.mxu0 %v503
    %699 = vmatmul.mubr.bf16.gmra.mxu0 %v502
    %v700 = vpop.f32.mrf.mxu0
    %v701 = vadd.f32 0.0, %v700
    %v702 = vpop.f32.mrf.mxu0
    %v703 = vpop.f32.mrf.mxu0
    %v704 = vadd.f32 0.0, %v703
    %v705 = vpop.f32.mrf.mxu0
    %706 = vmatprep.mubr.bf16.mxu0 %v505
    %707 = vmatmul.mubr.bf16.gmra.mxu0 %v504
    %v708 = vpop.f32.mrf.mxu0
    %v709 = vadd.f32 0.0, %v708
    %v710 = vpop.f32.mrf.mxu0
    %v711 = vpop.f32.mrf.mxu0
    %v712 = vpop.f32.mrf.mxu0
    %713 = vdwg.mxu0
    %714 = vmatprep.subr.bf16.mxu0 0
    %715 = vmatpush1.bf16.msra.mxu0 %v641
    %716 = vmatprep.subr.bf16.mxu0 0
    %717 = vmatpush1.bf16.msra.mxu0 %v640
    %718 = vmatprep.subr.bf16.mxu0 0
    %719 = vmatpush1.bf16.msra.mxu0 %v639
    %720 = vmatprep.subr.bf16.mxu0 0
    %721 = vmatpush1.bf16.msra.mxu0 %v638
    %722 = vmatprep.subr.bf16.mxu0 0
    %723 = vmatpush1.bf16.msra.mxu0 %v637
    %724 = vmatprep.subr.bf16.mxu0 0
    %725 = vmatpush1.bf16.msra.mxu0 %v636
    %726 = vmatprep.subr.bf16.mxu0 0
    %727 = vmatpush1.bf16.msra.mxu0 %v635
    %728 = vmatprep.subr.bf16.mxu0 0
    %729 = vmatpush1.bf16.msra.mxu0 %v634
    %730 = vmatprep.subr.bf16.mxu0 0
    %731 = vmatpush2.bf16.msra.mxu0 %v649
    %732 = vmatprep.subr.bf16.mxu0 0
    %733 = vmatpush2.bf16.msra.mxu0 %v648
    %734 = vmatprep.subr.bf16.mxu0 0
    %735 = vmatpush2.bf16.msra.mxu0 %v647
    %736 = vmatprep.subr.bf16.mxu0 0
    %737 = vmatpush2.bf16.msra.mxu0 %v646
    %738 = vmatprep.subr.bf16.mxu0 0
    %739 = vmatpush2.bf16.msra.mxu0 %v645
    %740 = vmatprep.subr.bf16.mxu0 0
    %741 = vmatpush2.bf16.msra.mxu0 %v644
    %742 = vmatprep.subr.bf16.mxu0 0
    %743 = vmatpush2.bf16.msra.mxu0 %v643
    %744 = vmatprep.subr.bf16.mxu0 0
    %745 = vmatpush2.bf16.msra.mxu0 %v642
    %746 = vmatprep.mubr.bf16.mxu0 %v487
    %747 = vmatmul.mubr.bf16.gmra.mxu0 %v486
    %v748 = vpop.f32.mrf.mxu0
    %v749 = vadd.f32 %v701, %v748
    %v750 = vpop.f32.mrf.mxu0
    %v751 = vpop.f32.mrf.mxu0
    %v752 = vadd.f32 %v704, %v751
    %v753 = vpop.f32.mrf.mxu0
    %754 = vmatprep.mubr.bf16.mxu0 %v489
    %755 = vmatmul.mubr.bf16.gmra.mxu0 %v488
    %v756 = vpop.f32.mrf.mxu0
    %v757 = vadd.f32 %v709, %v756
    %v758 = vpop.f32.mrf.mxu0
    %v759 = vpop.f32.mrf.mxu0
    %v760 = vpop.f32.mrf.mxu0
    %761 = vdwg.mxu0
    %v794 = vunpack.c.l.b16 %v538
    %v795 = vunpack.c.l.b16 %v539
    %v796 = vunpack.c.l.b16 %v540
    %v797 = vunpack.c.l.b16 %v541
    %v798 = vunpack.c.l.b16 %v542
    %v799 = vunpack.c.l.b16 %v543
    %v800 = vunpack.c.l.b16 %v544
    %v801 = vunpack.c.l.b16 %v545
    %v802 = vunpack.c.l.b16 %v546
    %v803 = vunpack.c.l.b16 %v547
    %v804 = vunpack.c.l.b16 %v548
    %v805 = vunpack.c.l.b16 %v549
    %v806 = vunpack.c.l.b16 %v550
    %v807 = vunpack.c.l.b16 %v551
    %v808 = vunpack.c.l.b16 %v552
    %v809 = vunpack.c.l.b16 %v553
    %v810 = vunpack.c.l.b16 %v554
    %v811 = vunpack.c.l.b16 %v555
    %v812 = vunpack.c.l.b16 %v556
    %v813 = vunpack.c.l.b16 %v557
    %v814 = vunpack.c.l.b16 %v558
    %v815 = vunpack.c.l.b16 %v559
    %v816 = vunpack.c.l.b16 %v560
    %v817 = vunpack.c.l.b16 %v561
    %v818 = vunpack.c.l.b16 %v562
    %v819 = vunpack.c.l.b16 %v563
    %v820 = vunpack.c.l.b16 %v564
    %v821 = vunpack.c.l.b16 %v565
    %v822 = vunpack.c.l.b16 %v566
    %v823 = vunpack.c.l.b16 %v567
    %v824 = vunpack.c.l.b16 %v568
    %v825 = vunpack.c.l.b16 %v569
    %v826 = vpack.c.b16 %v795, %v794
    %v827 = vpack.c.b16 %v797, %v796
    %v828 = vpack.c.b16 %v799, %v798
    %v829 = vpack.c.b16 %v801, %v800
    %v830 = vpack.c.b16 %v803, %v802
    %v831 = vpack.c.b16 %v805, %v804
    %v832 = vpack.c.b16 %v807, %v806
    %v833 = vpack.c.b16 %v809, %v808
    %v834 = vpack.c.b16 %v811, %v810
    %v835 = vpack.c.b16 %v813, %v812
    %v836 = vpack.c.b16 %v815, %v814
    %v837 = vpack.c.b16 %v817, %v816
    %v838 = vpack.c.b16 %v819, %v818
    %v839 = vpack.c.b16 %v821, %v820
    %v840 = vpack.c.b16 %v823, %v822
    %v841 = vpack.c.b16 %v825, %v824
    %858 = vmatprep.subr.bf16.mxu0 0
    %859 = vmatpush1.bf16.msra.mxu0 %v833
    %860 = vmatprep.subr.bf16.mxu0 0
    %861 = vmatpush1.bf16.msra.mxu0 %v832
    %862 = vmatprep.subr.bf16.mxu0 0
    %863 = vmatpush1.bf16.msra.mxu0 %v831
    %864 = vmatprep.subr.bf16.mxu0 0
    %865 = vmatpush1.bf16.msra.mxu0 %v830
    %866 = vmatprep.subr.bf16.mxu0 0
    %867 = vmatpush1.bf16.msra.mxu0 %v829
    %868 = vmatprep.subr.bf16.mxu0 0
    %869 = vmatpush1.bf16.msra.mxu0 %v828
    %870 = vmatprep.subr.bf16.mxu0 0
    %871 = vmatpush1.bf16.msra.mxu0 %v827
    %872 = vmatprep.subr.bf16.mxu0 0
    %873 = vmatpush1.bf16.msra.mxu0 %v826
    %874 = vmatprep.subr.bf16.mxu0 0
    %875 = vmatpush2.bf16.msra.mxu0 %v841
    %876 = vmatprep.subr.bf16.mxu0 0
    %877 = vmatpush2.bf16.msra.mxu0 %v840
    %878 = vmatprep.subr.bf16.mxu0 0
    %879 = vmatpush2.bf16.msra.mxu0 %v839
    %880 = vmatprep.subr.bf16.mxu0 0
    %881 = vmatpush2.bf16.msra.mxu0 %v838
    %882 = vmatprep.subr.bf16.mxu0 0
    %883 = vmatpush2.bf16.msra.mxu0 %v837
    %884 = vmatprep.subr.bf16.mxu0 0
    %885 = vmatpush2.bf16.msra.mxu0 %v836
    %886 = vmatprep.subr.bf16.mxu0 0
    %887 = vmatpush2.bf16.msra.mxu0 %v835
    %888 = vmatprep.subr.bf16.mxu0 0
    %889 = vmatpush2.bf16.msra.mxu0 %v834
    %890 = vmatprep.mubr.bf16.mxu0 %v487
    %891 = vmatmul.mubr.bf16.gmra.mxu0 %v486
    %v892 = vpop.f32.mrf.mxu0
    %v893 = vadd.f32 0.0, %v892
    %v894 = vpop.f32.mrf.mxu0
    %v895 = vpop.f32.mrf.mxu0
    %v896 = vadd.f32 0.0, %v895
    %v897 = vpop.f32.mrf.mxu0
    %898 = vmatprep.mubr.bf16.mxu0 %v489
    %899 = vmatmul.mubr.bf16.gmra.mxu0 %v488
    %v900 = vpop.f32.mrf.mxu0
    %v901 = vadd.f32 0.0, %v900
    %v902 = vpop.f32.mrf.mxu0
    %v903 = vpop.f32.mrf.mxu0
    %v904 = vpop.f32.mrf.mxu0
    %905 = vdwg.mxu0
    %v906 = vadd.f32 %v749, %v893
    %v907 = vadd.f32 %v752, %v896
    %v908 = vadd.f32 %v757, %v901
    %v911 = vrot.slane %v906, 4
    %v912 = vrot.slane %v907, 4
    %v913 = vsel %vm452, %v911, %v912
    %914 = vrot.lane.b32.xlu0 %v913, 118
    %v915 = vpop.permute.xlu0 %914
    %v917 = vadd.f32 %v906, %v915
    %918 = vrot.lane.b32.xlu0 %v907, 108
    %v919 = vpop.permute.xlu0 %918
    %v921 = vadd.f32 %v917, %v919
    %v923 = vrot.slane %v908, 4
    %v924 = vsel %vm452, %v912, %v923
    %925 = vrot.lane.b32.xlu0 %v924, 98
    %v926 = vpop.permute.xlu0 %925
    %v928 = vadd.f32 %v921, %v926
    %929 = vrot.lane.b32.xlu0 %v908, 88
    %v930 = vpop.permute.xlu0 %929
    %v932 = vadd.f32 %v928, %v930
    %v933 = vadd.f32 %v932, %v475
    %s934 = scalar_lea.vmem [#allocation3], 8
    %935 = vst.msk [vmem:[%s934] sm:$0xff] %vm477, %v933
    // Predicated region
    $region18: #{conv_example_forward.1} parent=1 // pred_check
      _
    $region19: #{conv_example_forward.1} parent=1 // pred_check_branch
      %937 = sbr.rel (0) target = $region21
    $region20: #{conv_example_forward.1} parent=1 // pred_region
      %s939 = ssub.s32 256, 256
      %940 = vsyncadd [#allocation4], %s939
      %s941 = sshll.u32 [#allocation3], 4
      %s942 = int_to_ptr.vmem [resolvable:$true] %s941
      %947 = dma.vmem_to_hbm [thread:$0]  %s942, 256, %s4, [#allocation4], 128, 128, 8
    $region21: #{conv_example_forward.1} parent=1 // pred_fallthru
      _
    // Predicated region
    $region22: #{conv_example_forward.1} parent=1 // pred_check
      _
    $region23: #{conv_example_forward.1} parent=1 // pred_check_branch
      %949 = sbr.rel (0) target = $region25
    $region24: #{conv_example_forward.1} parent=1 // pred_region
      %950 = dma.done [#allocation4], 256
    $region25: #{conv_example_forward.1} parent=1 // pred_fallthru
      _
    %951 = vsyncpa [#allocation4], 1

</llo_original>
